<compile_context>
chip_gen: v7x
topology: tpu7x:2x2x1
jax: 0.10.0
libtpu: 0.0.40
codegen_flags: <defaults>
</compile_context>

<pallas_src>
import jax
import jax.numpy as jnp
from jax.experimental import pallas as pl
from jax.experimental.pallas import tpu as pltpu

EPS = 1e-5


def _bn_kernel(x_ref, gamma_ref, beta_ref, o_ref):
    # x_ref / o_ref: (bs, TILE_C, step) ; gamma_ref / beta_ref: (1, TILE_C, 1)
    x = x_ref[...].astype(jnp.float32)
    n = x.shape[0] * x.shape[2]  # reduction size = bs * step (full extent in this block)
    inv_n = 1.0 / n

    # Per-channel mean / biased variance over (batch, step).
    mean = jnp.sum(x, axis=(0, 2), keepdims=True) * inv_n          # (1, TILE_C, 1)
    diff = x - mean
    var = jnp.sum(diff * diff, axis=(0, 2), keepdims=True) * inv_n  # (1, TILE_C, 1)
    inv = jax.lax.rsqrt(var + EPS)

    # Fold normalization + affine into per-channel scale/shift -> y = x*scale + shift.
    scale = inv * gamma_ref[...].astype(jnp.float32)                # (1, TILE_C, 1)
    shift = beta_ref[...].astype(jnp.float32) - mean * scale        # (1, TILE_C, 1)

    o_ref[...] = (x * scale + shift).astype(o_ref.dtype)


def _choose_tile_c(C, bs, step):
    """Largest channel tile (multiple of 8, exact divisor of C) whose f32 block stays
    under ~4 MiB, so in+out double-buffered blocks fit v5e's 16 MiB default scope."""
    bytes_per_channel = bs * step * 4  # f32 compute copy
    budget = 4 * 1024 * 1024
    max_tc = max(8, budget // max(bytes_per_channel, 1))
    if C <= max_tc:
        return C
    if C % 8 != 0:
        # Fall back to a full-C block (full-dim blocks satisfy the (8,128) rule).
        return C
    best = 8
    t = 8
    limit = min(C, int(max_tc))
    while t <= limit:
        if C % t == 0:
            best = t
        t += 8
    return best


def norm_data_forward(x, gamma, beta):
    """x: (bs, c, num_joints, step). gamma/beta: (c*num_joints,)."""
    bs, c, nj, step = x.shape
    C = c * nj

    x2 = x.reshape(bs, C, step)        # PyTorch view(bs, -1, step) — free reshape, no copy
    g3 = gamma.reshape(1, C, 1)
    b3 = beta.reshape(1, C, 1)

    tile_c = _choose_tile_c(C, bs, step)
    grid = (pl.cdiv(C, tile_c),)

    out = pl.pallas_call(
        _bn_kernel,
        out_shape=jax.ShapeDtypeStruct((bs, C, step), x.dtype),
        grid=grid,
        in_specs=[
            pl.BlockSpec((bs, tile_c, step), lambda j: (0, j, 0)),
            pl.BlockSpec((1, tile_c, 1), lambda j: (0, j, 0)),
            pl.BlockSpec((1, tile_c, 1), lambda j: (0, j, 0)),
        ],
        out_specs=pl.BlockSpec((bs, tile_c, step), lambda j: (0, j, 0)),
        compiler_params=pltpu.CompilerParams(
            dimension_semantics=("parallel",),
        ),
    )(x2, g3, b3)

    # PyTorch: view(bs, -1, num_joints, step) — another free reshape.
    return out.reshape(bs, c, nj, step)


def _reference(x, gamma, beta):
    bs, c, nj, step = x.shape
    C = c * nj
    x2 = x.reshape(bs, C, step).astype(jnp.float32)
    mean = jnp.mean(x2, axis=(0, 2), keepdims=True)
    var = jnp.mean((x2 - mean) ** 2, axis=(0, 2), keepdims=True)
    y = (x2 - mean) / jnp.sqrt(var + EPS)
    y = y * gamma.reshape(1, C, 1) + beta.reshape(1, C, 1)
    return y.reshape(bs, c, nj, step).astype(x.dtype)


if __name__ == "__main__":
    # Small shapes consistent with the module (dim=c, num_joints, step).
    bs, c, num_joints, step = 2, 4, 16, 16
    C = c * num_joints

    key = jax.random.PRNGKey(0)
    kx, kg, kb = jax.random.split(key, 3)
    x = jax.random.normal(kx, (bs, c, num_joints, step), dtype=jnp.float32)
    gamma = 1.0 + 0.1 * jax.random.normal(kg, (C,), dtype=jnp.float32)
    beta = 0.1 * jax.random.normal(kb, (C,), dtype=jnp.float32)

    out = norm_data_forward(x, gamma, beta)
    jax.block_until_ready(out)

    ref = _reference(x, gamma, beta)
    assert out.shape == (bs, c, num_joints, step)
    assert jnp.allclose(out, ref, atol=1e-5, rtol=1e-5), "mismatch vs reference"

    print("KERNEL_OK")
</pallas_src>

<mosaic_0001>
module attributes {stable_mosaic.version = 11 : i64} {
  func.func @_bn_kernel(%arg0: i32, %arg1: memref<2x64x16xf32, #tpu.memory_space<vmem>>, %arg2: memref<1x64x1xf32, #tpu.memory_space<vmem>>, %arg3: memref<1x64x1xf32, #tpu.memory_space<vmem>>, %arg4: memref<2x64x16xf32, #tpu.memory_space<vmem>>) attributes {dimension_semantics = [#tpu.dimension_semantics<parallel>], iteration_bounds = array<i64: 1>, scalar_prefetch = 0 : i64, scratch_operands = 0 : i64, tpu.core_type = #tpu.core_type<tc>, window_params = [{transform_indices = @transform_0, window_bounds = array<i64: 2, 64, 16>}, {transform_indices = @transform_1, window_bounds = array<i64: 1, 64, 1>}, {transform_indices = @transform_2, window_bounds = array<i64: 1, 64, 1>}, {transform_indices = @transform_3, window_bounds = array<i64: 2, 64, 16>}]} {
    %c0 = arith.constant 0 : index
    %c0_0 = arith.constant 0 : index
    %c0_1 = arith.constant 0 : index
    %0 = vector.load %arg1[%c0, %c0_0, %c0_1] : memref<2x64x16xf32, #tpu.memory_space<vmem>>, vector<2x64x16xf32>
    %cst = arith.constant dense<0.000000e+00> : vector<64xf32>
    %1 = vector.multi_reduction <add>, %0, %cst [0, 2] : vector<2x64x16xf32> to vector<64xf32>
    %2 = vector.shape_cast %1 : vector<64xf32> to vector<1x64x1xf32>
    %cst_2 = arith.constant 3.125000e-02 : f32
    %3 = vector.broadcast %cst_2 : f32 to vector<1x64x1xf32>
    %4 = arith.mulf %2, %3 : vector<1x64x1xf32>
    %5 = vector.broadcast %4 : vector<1x64x1xf32> to vector<2x64x16xf32>
    %6 = arith.subf %0, %5 : vector<2x64x16xf32>
    %7 = arith.mulf %6, %6 : vector<2x64x16xf32>
    %cst_3 = arith.constant dense<0.000000e+00> : vector<64xf32>
    %8 = vector.multi_reduction <add>, %7, %cst_3 [0, 2] : vector<2x64x16xf32> to vector<64xf32>
    %9 = vector.shape_cast %8 : vector<64xf32> to vector<1x64x1xf32>
    %cst_4 = arith.constant 3.125000e-02 : f32
    %10 = vector.broadcast %cst_4 : f32 to vector<1x64x1xf32>
    %11 = arith.mulf %9, %10 : vector<1x64x1xf32>
    %cst_5 = arith.constant 9.99999974E-6 : f32
    %12 = vector.broadcast %cst_5 : f32 to vector<1x64x1xf32>
    %13 = arith.addf %11, %12 : vector<1x64x1xf32>
    %14 = math.rsqrt %13 : vector<1x64x1xf32>
    %c0_6 = arith.constant 0 : index
    %c0_7 = arith.constant 0 : index
    %c0_8 = arith.constant 0 : index
    %15 = vector.load %arg2[%c0_6, %c0_7, %c0_8] : memref<1x64x1xf32, #tpu.memory_space<vmem>>, vector<1x64x1xf32>
    %16 = arith.mulf %14, %15 : vector<1x64x1xf32>
    %c0_9 = arith.constant 0 : index
    %c0_10 = arith.constant 0 : index
    %c0_11 = arith.constant 0 : index
    %17 = vector.load %arg3[%c0_9, %c0_10, %c0_11] : memref<1x64x1xf32, #tpu.memory_space<vmem>>, vector<1x64x1xf32>
    %18 = arith.mulf %4, %16 : vector<1x64x1xf32>
    %19 = arith.subf %17, %18 : vector<1x64x1xf32>
    %20 = vector.broadcast %16 : vector<1x64x1xf32> to vector<2x64x16xf32>
    %21 = arith.mulf %0, %20 : vector<2x64x16xf32>
    %22 = vector.broadcast %19 : vector<1x64x1xf32> to vector<2x64x16xf32>
    %23 = arith.addf %21, %22 : vector<2x64x16xf32>
    %c0_12 = arith.constant 0 : index
    %c0_13 = arith.constant 0 : index
    %c0_14 = arith.constant 0 : index
    %24 = vector.load %arg4[%c0_12, %c0_13, %c0_14] : memref<2x64x16xf32, #tpu.memory_space<vmem>>, vector<2x64x16xf32>
    tpu.vector_store %arg4[%c0_12, %c0_13, %c0_14], %23 {strides = array<i32>} : memref<2x64x16xf32, #tpu.memory_space<vmem>>, vector<2x64x16xf32>,
    return
  }
  func.func @transform_0(%arg0: i32) -> (i32, i32, i32) {
    %c0_i32 = arith.constant 0 : i32
    %c0_i32_0 = arith.constant 0 : i32
    %c0_i32_1 = arith.constant 0 : i32
    return %c0_i32, %arg0, %c0_i32_0 : i32, i32, i32
  }
  func.func @transform_1(%arg0: i32) -> (i32, i32, i32) {
    %c0_i32 = arith.constant 0 : i32
    %c0_i32_0 = arith.constant 0 : i32
    %c0_i32_1 = arith.constant 0 : i32
    return %c0_i32, %arg0, %c0_i32_0 : i32, i32, i32
  }
  func.func @transform_2(%arg0: i32) -> (i32, i32, i32) {
    %c0_i32 = arith.constant 0 : i32
    %c0_i32_0 = arith.constant 0 : i32
    %c0_i32_1 = arith.constant 0 : i32
    return %c0_i32, %arg0, %c0_i32_0 : i32, i32, i32
  }
  func.func @transform_3(%arg0: i32) -> (i32, i32, i32) {
    %c0_i32 = arith.constant 0 : i32
    %c0_i32_0 = arith.constant 0 : i32
    %c0_i32_1 = arith.constant 0 : i32
    return %c0_i32, %arg0, %c0_i32_0 : i32, i32, i32
  }
}

</mosaic_0001>

<llo_original>
// kernel: tpu_custom_call.1
$region0: #{tpu_custom_call.1}
  #allocation0 [shape = 'u32[]', space=smem, size = 0x4, offset = 0x4, fixed_abs, tag = 'smem constant byte address 0x4 - core index']
  #allocation1 [shape = 'u32[144,128]{1,0:T(1,128)}', space=vmem, size = 0x12000, scoped, tag = 'internal scratch']
  %s0 = inlined_call_operand.vmem [shape: f32[2,64,16], index: 0, kind: input, shape index: {}]
  %s1 = inlined_call_operand.vmem [shape: f32[1,64,1], index: 1, kind: input, shape index: {}]
  %s2 = inlined_call_operand.vmem [shape: f32[1,64,1], index: 2, kind: input, shape index: {}]
  %s3 = inlined_call_operand.vmem [shape: f32[2,64,16], index: 3, kind: output, shape index: {}]
  %s4 = sld [smem:[#allocation0]]
  $region22: #{tpu_custom_call.1} parent=0
    _
  %s6 = ssub.s32 1, %s4
  %s7 = scalar_select 0, %s6, %s4
  // Predicated region
  $region2: #{tpu_custom_call.1} parent=0 // pred_check
    _
  $region3: #{tpu_custom_call.1} parent=0 // pred_check_branch
    %9 = sbr.rel (0) target = $region5
  $region4: #{tpu_custom_call.1} parent=0 // pred_region
    _
  $region5: #{tpu_custom_call.1} parent=0 // pred_fallthru
    _
  // Predicated region
  $region6: #{tpu_custom_call.1} parent=0 // pred_check
    _
  $region7: #{tpu_custom_call.1} parent=0 // pred_check_branch
    %11 = sbr.rel (0) target = $region9
  $region8: #{tpu_custom_call.1} parent=0 // pred_region
    _
  $region9: #{tpu_custom_call.1} parent=0 // pred_fallthru
    _
  // Predicated region
  $region10: #{tpu_custom_call.1} parent=0 // pred_check
    _
  $region11: #{tpu_custom_call.1} parent=0 // pred_check_branch
    %13 = sbr.rel (0) target = $region13
  $region12: #{tpu_custom_call.1} parent=0 // pred_region
    _
  $region13: #{tpu_custom_call.1} parent=0 // pred_fallthru
    _
  %v14 = vld [vmem:[%s0] sm:$0xff]
  %v15 = vld [vmem:[%s0 + $0x8] sm:$0xff]
  %v16 = vld [vmem:[%s0 + $0x10] sm:$0xff]
  %v17 = vld [vmem:[%s0 + $0x18] sm:$0xff]
  %v18 = vld [vmem:[%s0 + $0x20] sm:$0xff]
  %v19 = vld [vmem:[%s0 + $0x28] sm:$0xff]
  %v20 = vld [vmem:[%s0 + $0x30] sm:$0xff]
  %v21 = vld [vmem:[%s0 + $0x38] sm:$0xff]
  %v22 = vld [vmem:[%s0 + $0x40] sm:$0xff]
  %v23 = vld [vmem:[%s0 + $0x48] sm:$0xff]
  %v24 = vld [vmem:[%s0 + $0x50] sm:$0xff]
  %v25 = vld [vmem:[%s0 + $0x58] sm:$0xff]
  %v26 = vld [vmem:[%s0 + $0x60] sm:$0xff]
  %v27 = vld [vmem:[%s0 + $0x68] sm:$0xff]
  %v28 = vld [vmem:[%s0 + $0x70] sm:$0xff]
  %v29 = vld [vmem:[%s0 + $0x78] sm:$0xff]
  %vm30 = vcmask 130048
  %v31 = vsel %vm30, %v14, 0.0
  %v32 = vsel %vm30, %v22, 0.0
  %v33 = vadd.f32 %v31, %v32
  %34 = vadd.xlane.f32.xlu0 %v33
  %v35 = vpop.xlane.xlu0 %34
  %v36 = vsel %vm30, %v15, 0.0
  %v37 = vsel %vm30, %v23, 0.0
  %v38 = vadd.f32 %v36, %v37
  %39 = vadd.xlane.f32.xlu0 %v38
  %v40 = vpop.xlane.xlu0 %39
  %v41 = vsel %vm30, %v16, 0.0
  %v42 = vsel %vm30, %v24, 0.0
  %v43 = vadd.f32 %v41, %v42
  %44 = vadd.xlane.f32.xlu0 %v43
  %v45 = vpop.xlane.xlu0 %44
  %v46 = vsel %vm30, %v17, 0.0
  %v47 = vsel %vm30, %v25, 0.0
  %v48 = vadd.f32 %v46, %v47
  %49 = vadd.xlane.f32.xlu0 %v48
  %v50 = vpop.xlane.xlu0 %49
  %v51 = vsel %vm30, %v18, 0.0
  %v52 = vsel %vm30, %v26, 0.0
  %v53 = vadd.f32 %v51, %v52
  %54 = vadd.xlane.f32.xlu0 %v53
  %v55 = vpop.xlane.xlu0 %54
  %v56 = vsel %vm30, %v19, 0.0
  %v57 = vsel %vm30, %v27, 0.0
  %v58 = vadd.f32 %v56, %v57
  %59 = vadd.xlane.f32.xlu0 %v58
  %v60 = vpop.xlane.xlu0 %59
  %v61 = vsel %vm30, %v20, 0.0
  %v62 = vsel %vm30, %v28, 0.0
  %v63 = vadd.f32 %v61, %v62
  %64 = vadd.xlane.f32.xlu0 %v63
  %v65 = vpop.xlane.xlu0 %64
  %v66 = vsel %vm30, %v21, 0.0
  %v67 = vsel %vm30, %v29, 0.0
  %v68 = vadd.f32 %v66, %v67
  %69 = vadd.xlane.f32.xlu0 %v68
  %v70 = vpop.xlane.xlu0 %69
  %v71 = vmul.f32 %v35, 0.03125
  %v72 = vmul.f32 %v40, 0.03125
  %v73 = vmul.f32 %v45, 0.03125
  %v74 = vmul.f32 %v50, 0.03125
  %v75 = vmul.f32 %v55, 0.03125
  %v76 = vmul.f32 %v60, 0.03125
  %v77 = vmul.f32 %v65, 0.03125
  %v78 = vmul.f32 %v70, 0.03125
  %v79 = vsub.f32 %v14, %v71
  %v80 = vsub.f32 %v15, %v72
  %v81 = vsub.f32 %v16, %v73
  %v82 = vsub.f32 %v17, %v74
  %v83 = vsub.f32 %v18, %v75
  %v84 = vsub.f32 %v19, %v76
  %v85 = vsub.f32 %v20, %v77
  %v86 = vsub.f32 %v21, %v78
  %v87 = vsub.f32 %v22, %v71
  %v88 = vsub.f32 %v23, %v72
  %v89 = vsub.f32 %v24, %v73
  %v90 = vsub.f32 %v25, %v74
  %v91 = vsub.f32 %v26, %v75
  %v92 = vsub.f32 %v27, %v76
  %v93 = vsub.f32 %v28, %v77
  %v94 = vsub.f32 %v29, %v78
  %v95 = vmul.f32 %v79, %v79
  %v96 = vmul.f32 %v80, %v80
  %v97 = vmul.f32 %v81, %v81
  %v98 = vmul.f32 %v82, %v82
  %v99 = vmul.f32 %v83, %v83
  %v100 = vmul.f32 %v84, %v84
  %v101 = vmul.f32 %v85, %v85
  %v102 = vmul.f32 %v86, %v86
  %v103 = vmul.f32 %v87, %v87
  %v104 = vmul.f32 %v88, %v88
  %v105 = vmul.f32 %v89, %v89
  %v106 = vmul.f32 %v90, %v90
  %v107 = vmul.f32 %v91, %v91
  %v108 = vmul.f32 %v92, %v92
  %v109 = vmul.f32 %v93, %v93
  %v110 = vmul.f32 %v94, %v94
  %v111 = vsel %vm30, %v95, 0.0
  %v112 = vsel %vm30, %v103, 0.0
  %v113 = vadd.f32 %v111, %v112
  %114 = vadd.xlane.f32.xlu0 %v113
  %v115 = vpop.xlane.xlu0 %114
  %v116 = vsel %vm30, %v96, 0.0
  %v117 = vsel %vm30, %v104, 0.0
  %v118 = vadd.f32 %v116, %v117
  %119 = vadd.xlane.f32.xlu0 %v118
  %v120 = vpop.xlane.xlu0 %119
  %v121 = vsel %vm30, %v97, 0.0
  %v122 = vsel %vm30, %v105, 0.0
  %v123 = vadd.f32 %v121, %v122
  %124 = vadd.xlane.f32.xlu0 %v123
  %v125 = vpop.xlane.xlu0 %124
  %v126 = vsel %vm30, %v98, 0.0
  %v127 = vsel %vm30, %v106, 0.0
  %v128 = vadd.f32 %v126, %v127
  %129 = vadd.xlane.f32.xlu0 %v128
  %v130 = vpop.xlane.xlu0 %129
  %v131 = vsel %vm30, %v99, 0.0
  %v132 = vsel %vm30, %v107, 0.0
  %v133 = vadd.f32 %v131, %v132
  %134 = vadd.xlane.f32.xlu0 %v133
  %v135 = vpop.xlane.xlu0 %134
  %v136 = vsel %vm30, %v100, 0.0
  %v137 = vsel %vm30, %v108, 0.0
  %v138 = vadd.f32 %v136, %v137
  %139 = vadd.xlane.f32.xlu0 %v138
  %v140 = vpop.xlane.xlu0 %139
  %v141 = vsel %vm30, %v101, 0.0
  %v142 = vsel %vm30, %v109, 0.0
  %v143 = vadd.f32 %v141, %v142
  %144 = vadd.xlane.f32.xlu0 %v143
  %v145 = vpop.xlane.xlu0 %144
  %v146 = vsel %vm30, %v102, 0.0
  %v147 = vsel %vm30, %v110, 0.0
  %v148 = vadd.f32 %v146, %v147
  %149 = vadd.xlane.f32.xlu0 %v148
  %v150 = vpop.xlane.xlu0 %149
  %v151 = vmul.f32 %v115, 0.03125
  %v152 = vmul.f32 %v120, 0.03125
  %v153 = vmul.f32 %v125, 0.03125
  %v154 = vmul.f32 %v130, 0.03125
  %v155 = vmul.f32 %v135, 0.03125
  %v156 = vmul.f32 %v140, 0.03125
  %v157 = vmul.f32 %v145, 0.03125
  %v158 = vmul.f32 %v150, 0.03125
  %v159 = vadd.f32 %v151, 1e-05
  %v160 = vadd.f32 %v152, 1e-05
  %v161 = vadd.f32 %v153, 1e-05
  %v162 = vadd.f32 %v154, 1e-05
  %v163 = vadd.f32 %v155, 1e-05
  %v164 = vadd.f32 %v156, 1e-05
  %v165 = vadd.f32 %v157, 1e-05
  %v166 = vadd.f32 %v158, 1e-05
  %v167 = vrsqrt.pop %v159
  %v168 = vrsqrt.pop %v160
  %v169 = vrsqrt.pop %v161
  %v170 = vrsqrt.pop %v162
  %v171 = vrsqrt.pop %v163
  %v172 = vrsqrt.pop %v164
  %v173 = vrsqrt.pop %v165
  %v174 = vrsqrt.pop %v166
  %v175 = vld [vmem:[%s1] sm:$0xff]
  %v176 = vld [vmem:[%s1 + $0x8] sm:$0xff]
  %v177 = vld [vmem:[%s1 + $0x10] sm:$0xff]
  %v178 = vld [vmem:[%s1 + $0x18] sm:$0xff]
  %v179 = vld [vmem:[%s1 + $0x20] sm:$0xff]
  %v180 = vld [vmem:[%s1 + $0x28] sm:$0xff]
  %v181 = vld [vmem:[%s1 + $0x30] sm:$0xff]
  %v182 = vld [vmem:[%s1 + $0x38] sm:$0xff]
  %v183 = vmul.f32 %v167, %v175
  %v184 = vmul.f32 %v168, %v176
  %v185 = vmul.f32 %v169, %v177
  %v186 = vmul.f32 %v170, %v178
  %v187 = vmul.f32 %v171, %v179
  %v188 = vmul.f32 %v172, %v180
  %v189 = vmul.f32 %v173, %v181
  %v190 = vmul.f32 %v174, %v182
  %v191 = vld [vmem:[%s2] sm:$0xff]
  %v192 = vld [vmem:[%s2 + $0x8] sm:$0xff]
  %v193 = vld [vmem:[%s2 + $0x10] sm:$0xff]
  %v194 = vld [vmem:[%s2 + $0x18] sm:$0xff]
  %v195 = vld [vmem:[%s2 + $0x20] sm:$0xff]
  %v196 = vld [vmem:[%s2 + $0x28] sm:$0xff]
  %v197 = vld [vmem:[%s2 + $0x30] sm:$0xff]
  %v198 = vld [vmem:[%s2 + $0x38] sm:$0xff]
  %v199 = vmul.f32 %v71, %v183
  %v200 = vmul.f32 %v72, %v184
  %v201 = vmul.f32 %v73, %v185
  %v202 = vmul.f32 %v74, %v186
  %v203 = vmul.f32 %v75, %v187
  %v204 = vmul.f32 %v76, %v188
  %v205 = vmul.f32 %v77, %v189
  %v206 = vmul.f32 %v78, %v190
  %v207 = vsub.f32 %v191, %v199
  %v208 = vsub.f32 %v192, %v200
  %v209 = vsub.f32 %v193, %v201
  %v210 = vsub.f32 %v194, %v202
  %v211 = vsub.f32 %v195, %v203
  %v212 = vsub.f32 %v196, %v204
  %v213 = vsub.f32 %v197, %v205
  %v214 = vsub.f32 %v198, %v206
  %216 = vset.pattern.permute.xlu0 0
  %217 = vperm.xlu0 %216, %v183
  %v218 = vpop.permute.xlu0 %217
  %221 = vset.pattern.permute.xlu0 0
  %222 = vperm.xlu0 %221, %v184
  %v223 = vpop.permute.xlu0 %222
  %226 = vset.pattern.permute.xlu0 0
  %227 = vperm.xlu0 %226, %v185
  %v228 = vpop.permute.xlu0 %227
  %231 = vset.pattern.permute.xlu0 0
  %232 = vperm.xlu0 %231, %v186
  %v233 = vpop.permute.xlu0 %232
  %236 = vset.pattern.permute.xlu0 0
  %237 = vperm.xlu0 %236, %v187
  %v238 = vpop.permute.xlu0 %237
  %241 = vset.pattern.permute.xlu0 0
  %242 = vperm.xlu0 %241, %v188
  %v243 = vpop.permute.xlu0 %242
  %246 = vset.pattern.permute.xlu0 0
  %247 = vperm.xlu0 %246, %v189
  %v248 = vpop.permute.xlu0 %247
  %251 = vset.pattern.permute.xlu0 0
  %252 = vperm.xlu0 %251, %v190
  %v253 = vpop.permute.xlu0 %252
  %v255 = vmul.f32 %v14, %v218
  %v256 = vmul.f32 %v15, %v223
  %v257 = vmul.f32 %v16, %v228
  %v258 = vmul.f32 %v17, %v233
  %v259 = vmul.f32 %v18, %v238
  %v260 = vmul.f32 %v19, %v243
  %v261 = vmul.f32 %v20, %v248
  %v262 = vmul.f32 %v21, %v253
  %v263 = vmul.f32 %v22, %v218
  %v264 = vmul.f32 %v23, %v223
  %v265 = vmul.f32 %v24, %v228
  %v266 = vmul.f32 %v25, %v233
  %v267 = vmul.f32 %v26, %v238
  %v268 = vmul.f32 %v27, %v243
  %v269 = vmul.f32 %v28, %v248
  %v270 = vmul.f32 %v29, %v253
  %272 = vset.pattern.permute.xlu0 0
  %273 = vperm.xlu0 %272, %v207
  %v274 = vpop.permute.xlu0 %273
  %277 = vset.pattern.permute.xlu0 0
  %278 = vperm.xlu0 %277, %v208
  %v279 = vpop.permute.xlu0 %278
  %282 = vset.pattern.permute.xlu0 0
  %283 = vperm.xlu0 %282, %v209
  %v284 = vpop.permute.xlu0 %283
  %287 = vset.pattern.permute.xlu0 0
  %288 = vperm.xlu0 %287, %v210
  %v289 = vpop.permute.xlu0 %288
  %292 = vset.pattern.permute.xlu0 0
  %293 = vperm.xlu0 %292, %v211
  %v294 = vpop.permute.xlu0 %293
  %297 = vset.pattern.permute.xlu0 0
  %298 = vperm.xlu0 %297, %v212
  %v299 = vpop.permute.xlu0 %298
  %302 = vset.pattern.permute.xlu0 0
  %303 = vperm.xlu0 %302, %v213
  %v304 = vpop.permute.xlu0 %303
  %307 = vset.pattern.permute.xlu0 0
  %308 = vperm.xlu0 %307, %v214
  %v309 = vpop.permute.xlu0 %308
  %v311 = vadd.f32 %v255, %v274
  %v312 = vadd.f32 %v256, %v279
  %v313 = vadd.f32 %v257, %v284
  %v314 = vadd.f32 %v258, %v289
  %v315 = vadd.f32 %v259, %v294
  %v316 = vadd.f32 %v260, %v299
  %v317 = vadd.f32 %v261, %v304
  %v318 = vadd.f32 %v262, %v309
  %v319 = vadd.f32 %v263, %v274
  %v320 = vadd.f32 %v264, %v279
  %v321 = vadd.f32 %v265, %v284
  %v322 = vadd.f32 %v266, %v289
  %v323 = vadd.f32 %v267, %v294
  %v324 = vadd.f32 %v268, %v299
  %v325 = vadd.f32 %v269, %v304
  %v326 = vadd.f32 %v270, %v309
  %327 = vst.msk [vmem:[%s3] sm:$0xff] %vm30, %v311
  %328 = vst.msk [vmem:[%s3 + $0x8] sm:$0xff] %vm30, %v312
  %329 = vst.msk [vmem:[%s3 + $0x10] sm:$0xff] %vm30, %v313
  %330 = vst.msk [vmem:[%s3 + $0x18] sm:$0xff] %vm30, %v314
  %331 = vst.msk [vmem:[%s3 + $0x20] sm:$0xff] %vm30, %v315
  %332 = vst.msk [vmem:[%s3 + $0x28] sm:$0xff] %vm30, %v316
  %333 = vst.msk [vmem:[%s3 + $0x30] sm:$0xff] %vm30, %v317
  %334 = vst.msk [vmem:[%s3 + $0x38] sm:$0xff] %vm30, %v318
  %335 = vst.msk [vmem:[%s3 + $0x40] sm:$0xff] %vm30, %v319
  %336 = vst.msk [vmem:[%s3 + $0x48] sm:$0xff] %vm30, %v320
  %337 = vst.msk [vmem:[%s3 + $0x50] sm:$0xff] %vm30, %v321
  %338 = vst.msk [vmem:[%s3 + $0x58] sm:$0xff] %vm30, %v322
  %339 = vst.msk [vmem:[%s3 + $0x60] sm:$0xff] %vm30, %v323
  %340 = vst.msk [vmem:[%s3 + $0x68] sm:$0xff] %vm30, %v324
  %341 = vst.msk [vmem:[%s3 + $0x70] sm:$0xff] %vm30, %v325
  %342 = vst.msk [vmem:[%s3 + $0x78] sm:$0xff] %vm30, %v326
  // Predicated region
  $region14: #{tpu_custom_call.1} parent=0 // pred_check
    _
  $region15: #{tpu_custom_call.1} parent=0 // pred_check_branch
    %344 = sbr.rel (0) target = $region17
  $region16: #{tpu_custom_call.1} parent=0 // pred_region
    _
  $region17: #{tpu_custom_call.1} parent=0 // pred_fallthru
    _
  // Predicated region
  $region18: #{tpu_custom_call.1} parent=0 // pred_check
    _
  $region19: #{tpu_custom_call.1} parent=0 // pred_check_branch
    %346 = sbr.rel (0) target = $region21
  $region20: #{tpu_custom_call.1} parent=0 // pred_region
    _
  $region21: #{tpu_custom_call.1} parent=0 // pred_fallthru
    _

</llo_original>
